<compile_context>
chip_gen: v7x
topology: tpu7x:2x2x1
jax: 0.10.0
libtpu: 0.0.40
codegen_flags: <defaults>
</compile_context>

<pallas_src>
import functools
import math

import jax
import jax.numpy as jnp
from jax.experimental import pallas as pl
from jax.experimental.pallas import tpu as pltpu

LANES = 128
TARGET_BLOCK_BYTES = 2 * 1024 * 1024   # ~2 MiB per input block per buffer


def _ganloss_disc_kernel(d_ref, dg_ref, out_real_ref, out_gen_ref, *,
                         rows_d, rows_dg, nblk_d, nblk_dg, nblk_inner,
                         acc_rows):
    c = pl.program_id(0)          # core-parallel axis (size 1 on 1-TC chips)
    i = pl.program_id(1)          # row-block sweep (reduction axis)
    blk = c * nblk_inner + i      # global block id handled by this core/step
    rt = d_ref.shape[0]           # static row-tile size

    @pl.when(i == 0)
    def _init():
        out_real_ref[...] = jnp.zeros_like(out_real_ref)
        out_gen_ref[...] = jnp.zeros_like(out_gen_ref)

    def _accumulate(x_ref, out_ref, rows_valid, nblk, bias):
        def _reduce_rows(x):
            sq = x * x
            return sq.reshape(rt // acc_rows, acc_rows, LANES).sum(axis=0)

        # Fast path: interior block — every row valid, no masking at all.
        @pl.when(blk < nblk - 1)
        def _fast():
            x = x_ref[...].astype(jnp.float32)
            if bias:                      # static: skip the +0.0 for dg
                x = x + bias
            out_ref[...] += _reduce_rows(x)

        # Tail path: last valid block for this input — mask rows past the end
        # against a scalar remainder (scalar ALU) with a single row iota.
        @pl.when(blk == nblk - 1)
        def _tail():
            rem_rows = rows_valid - blk * rt
            rid = jax.lax.broadcasted_iota(jnp.int32, (rt, LANES), 0)
            x = x_ref[...].astype(jnp.float32)
            if bias:
                x = x + bias
            x = jnp.where(rid < rem_rows, x, 0.0)
            out_ref[...] += _reduce_rows(x)

        # blk >= nblk: block out of range for this input -> skipped entirely.

    _accumulate(d_ref, out_real_ref, rows_d, nblk_d, -1.0)   # (d - 1)^2
    _accumulate(dg_ref, out_gen_ref, rows_dg, nblk_dg, 0.0)  # dg^2


def _num_tensorcores():
    """TensorCores per JAX device: 2 on megacore-style chips (v4/v5p, v7x),
    1 on v5e/v6e. Defaulting to 1 is always correct (just no core split)."""
    try:
        kind = jax.devices()[0].device_kind.lower()
    except Exception:
        return 1
    if "v7" in kind or "v4" in kind or "v5p" in kind:
        return 2
    return 1


def _round_up(x, m):
    return (x + m - 1) // m * m


def _sublane_pack(dtype):
    # rows per packed (sublane, lane) tile: 8 f32, 16 bf16, 32 int8/fp8.
    return max(8, 32 // jnp.dtype(dtype).itemsize)


def _prep_slab(x):
    """Lane-dense (rows, 128) view of x's 128-aligned prefix, plus its tail.

    No dtype cast and no whole-array pad: when x.size % 128 == 0 (the common
    case) the reshape is free; otherwise only the aligned prefix feeds the
    kernel and the <=127-element tail is handled with plain jnp by the caller.
    """
    flat = x.reshape(-1)
    n = flat.shape[0]
    rows = n // LANES
    n_main = rows * LANES
    tail = flat[n_main:] if n_main < n else None
    if rows == 0:
        # Input smaller than one lane row: dummy slab, fully masked in-kernel.
        main = jnp.zeros((8, LANES), dtype=x.dtype)
    elif n_main == n:
        main = flat.reshape(rows, LANES)
    else:
        # Prefix slice of a misaligned input (cheaper than the old full pad).
        main = flat[:n_main].reshape(rows, LANES)
    return main, tail, rows


def _tail_sq_sum(tail, bias):
    if tail is None:
        return jnp.float32(0.0)
    t = tail.astype(jnp.float32)
    if bias:
        t = t + bias
    return jnp.sum(t * t)


def gan_loss_disc(d, dg):
    """d = discriminator output on real images, dg = on generated images.
    Returns the scalar f32 LSGAN discriminator loss (matches torch)."""
    n_real = d.size
    n_gen = dg.size
    if n_real == 0 or n_gen == 0:
        raise ValueError("gan_loss_disc: inputs must be non-empty")

    d_mat, d_tail, rows_d = _prep_slab(d)
    dg_mat, dg_tail, rows_dg = _prep_slab(dg)

    # dtype-aware row tile: ~TARGET_BLOCK_BYTES per input block, rounded to
    # the strictest sublane-packing multiple of the two input dtypes.
    itemsize = max(jnp.dtype(d.dtype).itemsize, jnp.dtype(dg.dtype).itemsize)
    pack = max(_sublane_pack(d.dtype), _sublane_pack(dg.dtype))
    row_cap = max(pack, TARGET_BLOCK_BYTES // (LANES * itemsize))
    row_tile = min(row_cap, _round_up(max(rows_d, rows_dg, 1), pack))
    # accumulator depth: up to 64 rows, must divide row_tile (both mult. of 8)
    acc_rows = math.gcd(row_tile, 64)

    nblk_d = max(1, pl.cdiv(rows_d, row_tile))
    nblk_dg = max(1, pl.cdiv(rows_dg, row_tile))
    nblk_total = max(nblk_d, nblk_dg)

    num_cores = max(1, min(_num_tensorcores(), nblk_total))
    nblk_inner = pl.cdiv(nblk_total, num_cores)

    def _in_map(nblk):
        def idx(c, i):
            # Clamp so pipelined DMAs never walk off a slab when the two
            # inputs differ in size; out-of-range blocks are skipped in-kernel
            # and the repeated (clamped) index is not re-DMA'd by Pallas.
            return (jnp.minimum(c * nblk_inner + i, nblk - 1), 0)
        return idx

    kernel = functools.partial(
        _ganloss_disc_kernel,
        rows_d=rows_d, rows_dg=rows_dg,
        nblk_d=nblk_d, nblk_dg=nblk_dg,
        nblk_inner=nblk_inner, acc_rows=acc_rows)

    out_shape = jax.ShapeDtypeStruct((num_cores * acc_rows, LANES), jnp.float32)
    out_spec = pl.BlockSpec((acc_rows, LANES), lambda c, i: (c, 0))

    out_real, out_gen = pl.pallas_call(
        kernel,
        out_shape=(out_shape, out_shape),
        grid_spec=pltpu.PrefetchScalarGridSpec(
            num_scalar_prefetch=0,
            grid=(num_cores, nblk_inner),
            in_specs=[
                pl.BlockSpec((row_tile, LANES), _in_map(nblk_d)),
                pl.BlockSpec((row_tile, LANES), _in_map(nblk_dg)),
            ],
            out_specs=[out_spec, out_spec],
        ),
        compiler_params=pltpu.CompilerParams(
            dimension_semantics=("parallel", "arbitrary")),
    )(d_mat, dg_mat)

    # Tiny wrapper-side reduces: combine per-core partial accumulators and the
    # (rare) sub-128-element tails.
    s_real = jnp.sum(out_real) + _tail_sq_sum(d_tail, -1.0)
    s_gen = jnp.sum(out_gen) + _tail_sq_sum(dg_tail, 0.0)
    return (0.5 / n_real) * s_real + (0.5 / n_gen) * s_gen


if __name__ == "__main__":
    key = jax.random.PRNGKey(0)
    k1, k2 = jax.random.split(key)
    # Discriminator outputs on real / generated images (NCHW-style 4D maps).
    d = jax.random.normal(k1, (2, 4, 16, 16), dtype=jnp.float32)
    dg = jax.random.normal(k2, (2, 4, 16, 16), dtype=jnp.float32)

    loss = gan_loss_disc(d, dg)
    jax.block_until_ready(loss)

    # Pure-JAX reference check.
    ref = 0.5 * jnp.mean((d - 1.0) ** 2) + 0.5 * jnp.mean(dg ** 2)
    assert jnp.allclose(loss, ref, atol=1e-6, rtol=1e-5), (loss, ref)

    print("KERNEL_OK")
</pallas_src>

<mosaic_0001>
module attributes {stable_mosaic.version = 11 : i64} {
  func.func @_ganloss_disc_kernel(%arg0: i32, %arg1: i32, %arg2: memref<16x128xf32, #tpu.memory_space<vmem>>, %arg3: memref<16x128xf32, #tpu.memory_space<vmem>>, %arg4: memref<16x128xf32, #tpu.memory_space<vmem>>, %arg5: memref<16x128xf32, #tpu.memory_space<vmem>>) attributes {dimension_semantics = [#tpu.dimension_semantics<parallel>, #tpu.dimension_semantics<arbitrary>], iteration_bounds = array<i64: 1, 1>, scalar_prefetch = 0 : i64, scratch_operands = 0 : i64, tpu.core_type = #tpu.core_type<tc>, window_params = [{transform_indices = @transform_0, window_bounds = array<i64: 16, 128>}, {transform_indices = @transform_1, window_bounds = array<i64: 16, 128>}, {transform_indices = @transform_2, window_bounds = array<i64: 16, 128>}, {transform_indices = @transform_3, window_bounds = array<i64: 16, 128>}]} {
    %c1_i32 = arith.constant 1 : i32
    %0 = arith.muli %arg0, %c1_i32 : i32
    %1 = arith.addi %0, %arg1 : i32
    %c0_i32 = arith.constant 0 : i32
    %2 = arith.cmpi eq, %arg1, %c0_i32 : i32
    %3 = arith.extui %2 : i1 to i32
    %c0_i32_0 = arith.constant 0 : i32
    %4 = arith.cmpi ne, %3, %c0_i32_0 : i32
    scf.if %4 {
      %cst = arith.constant 0.000000e+00 : f32
      %17 = vector.broadcast %cst : f32 to vector<16x128xf32>
      %c0 = arith.constant 0 : index
      %c0_9 = arith.constant 0 : index
      %18 = vector.load %arg4[%c0, %c0_9] : memref<16x128xf32, #tpu.memory_space<vmem>>, vector<16x128xf32>
      tpu.vector_store %arg4[%c0, %c0_9], %17 {strides = array<i32>} : memref<16x128xf32, #tpu.memory_space<vmem>>, vector<16x128xf32>,
      %cst_10 = arith.constant 0.000000e+00 : f32
      %19 = vector.broadcast %cst_10 : f32 to vector<16x128xf32>
      %c0_11 = arith.constant 0 : index
      %c0_12 = arith.constant 0 : index
      %20 = vector.load %arg5[%c0_11, %c0_12] : memref<16x128xf32, #tpu.memory_space<vmem>>, vector<16x128xf32>
      tpu.vector_store %arg5[%c0_11, %c0_12], %19 {strides = array<i32>} : memref<16x128xf32, #tpu.memory_space<vmem>>, vector<16x128xf32>,
    } else {
    }
    %c0_i32_1 = arith.constant 0 : i32
    %5 = arith.cmpi slt, %1, %c0_i32_1 : i32
    %6 = arith.extui %5 : i1 to i32
    %c0_i32_2 = arith.constant 0 : i32
    %7 = arith.cmpi ne, %6, %c0_i32_2 : i32
    scf.if %7 {
      %c0 = arith.constant 0 : index
      %c0_9 = arith.constant 0 : index
      %17 = vector.load %arg2[%c0, %c0_9] : memref<16x128xf32, #tpu.memory_space<vmem>>, vector<16x128xf32>
      %cst = arith.constant -1.000000e+00 : f32
      %18 = vector.broadcast %cst : f32 to vector<16x128xf32>
      %19 = arith.addf %17, %18 : vector<16x128xf32>
      %c0_10 = arith.constant 0 : index
      %c0_11 = arith.constant 0 : index
      %20 = vector.load %arg4[%c0_10, %c0_11] : memref<16x128xf32, #tpu.memory_space<vmem>>, vector<16x128xf32>
      %21 = arith.mulf %19, %19 : vector<16x128xf32>
      %22 = vector.shape_cast %21 : vector<16x128xf32> to vector<1x16x128xf32>
      %cst_12 = arith.constant dense<0.000000e+00> : vector<16x128xf32>
      %23 = vector.multi_reduction <add>, %22, %cst_12 [0] : vector<1x16x128xf32> to vector<16x128xf32>
      %24 = arith.addf %20, %23 : vector<16x128xf32>
      %c0_13 = arith.constant 0 : index
      %c0_14 = arith.constant 0 : index
      %25 = vector.load %arg4[%c0_13, %c0_14] : memref<16x128xf32, #tpu.memory_space<vmem>>, vector<16x128xf32>
      tpu.vector_store %arg4[%c0_13, %c0_14], %24 {strides = array<i32>} : memref<16x128xf32, #tpu.memory_space<vmem>>, vector<16x128xf32>,
    } else {
    }
    %c0_i32_3 = arith.constant 0 : i32
    %8 = arith.cmpi eq, %1, %c0_i32_3 : i32
    %9 = arith.extui %8 : i1 to i32
    %c0_i32_4 = arith.constant 0 : i32
    %10 = arith.cmpi ne, %9, %c0_i32_4 : i32
    scf.if %10 {
      %c16_i32 = arith.constant 16 : i32
      %17 = arith.muli %1, %c16_i32 : i32
      %c16_i32_9 = arith.constant 16 : i32
      %18 = arith.subi %c16_i32_9, %17 : i32
      %19 = tpu.iota {dimensions = array<i32: 0>} : vector<16x128xi32>
      %c0 = arith.constant 0 : index
      %c0_10 = arith.constant 0 : index
      %20 = vector.load %arg2[%c0, %c0_10] : memref<16x128xf32, #tpu.memory_space<vmem>>, vector<16x128xf32>
      %cst = arith.constant -1.000000e+00 : f32
      %21 = vector.broadcast %cst : f32 to vector<16x128xf32>
      %22 = arith.addf %20, %21 : vector<16x128xf32>
      %23 = vector.broadcast %18 : i32 to vector<16x128xi32>
      %24 = arith.cmpi slt, %19, %23 : vector<16x128xi32>
      %cst_11 = arith.constant 0.000000e+00 : f32
      %25 = vector.broadcast %cst_11 : f32 to vector<16x128xf32>
      %26 = arith.select %24, %22, %25 : vector<16x128xi1>, vector<16x128xf32>
      %c0_12 = arith.constant 0 : index
      %c0_13 = arith.constant 0 : index
      %27 = vector.load %arg4[%c0_12, %c0_13] : memref<16x128xf32, #tpu.memory_space<vmem>>, vector<16x128xf32>
      %28 = arith.mulf %26, %26 : vector<16x128xf32>
      %29 = vector.shape_cast %28 : vector<16x128xf32> to vector<1x16x128xf32>
      %cst_14 = arith.constant dense<0.000000e+00> : vector<16x128xf32>
      %30 = vector.multi_reduction <add>, %29, %cst_14 [0] : vector<1x16x128xf32> to vector<16x128xf32>
      %31 = arith.addf %27, %30 : vector<16x128xf32>
      %c0_15 = arith.constant 0 : index
      %c0_16 = arith.constant 0 : index
      %32 = vector.load %arg4[%c0_15, %c0_16] : memref<16x128xf32, #tpu.memory_space<vmem>>, vector<16x128xf32>
      tpu.vector_store %arg4[%c0_15, %c0_16], %31 {strides = array<i32>} : memref<16x128xf32, #tpu.memory_space<vmem>>, vector<16x128xf32>,
    } else {
    }
    %c0_i32_5 = arith.constant 0 : i32
    %11 = arith.cmpi slt, %1, %c0_i32_5 : i32
    %12 = arith.extui %11 : i1 to i32
    %c0_i32_6 = arith.constant 0 : i32
    %13 = arith.cmpi ne, %12, %c0_i32_6 : i32
    scf.if %13 {
      %c0 = arith.constant 0 : index
      %c0_9 = arith.constant 0 : index
      %17 = vector.load %arg3[%c0, %c0_9] : memref<16x128xf32, #tpu.memory_space<vmem>>, vector<16x128xf32>
      %c0_10 = arith.constant 0 : index
      %c0_11 = arith.constant 0 : index
      %18 = vector.load %arg5[%c0_10, %c0_11] : memref<16x128xf32, #tpu.memory_space<vmem>>, vector<16x128xf32>
      %19 = arith.mulf %17, %17 : vector<16x128xf32>
      %20 = vector.shape_cast %19 : vector<16x128xf32> to vector<1x16x128xf32>
      %cst = arith.constant dense<0.000000e+00> : vector<16x128xf32>
      %21 = vector.multi_reduction <add>, %20, %cst [0] : vector<1x16x128xf32> to vector<16x128xf32>
      %22 = arith.addf %18, %21 : vector<16x128xf32>
      %c0_12 = arith.constant 0 : index
      %c0_13 = arith.constant 0 : index
      %23 = vector.load %arg5[%c0_12, %c0_13] : memref<16x128xf32, #tpu.memory_space<vmem>>, vector<16x128xf32>
      tpu.vector_store %arg5[%c0_12, %c0_13], %22 {strides = array<i32>} : memref<16x128xf32, #tpu.memory_space<vmem>>, vector<16x128xf32>,
    } else {
    }
    %c0_i32_7 = arith.constant 0 : i32
    %14 = arith.cmpi eq, %1, %c0_i32_7 : i32
    %15 = arith.extui %14 : i1 to i32
    %c0_i32_8 = arith.constant 0 : i32
    %16 = arith.cmpi ne, %15, %c0_i32_8 : i32
    scf.if %16 {
      %c16_i32 = arith.constant 16 : i32
      %17 = arith.muli %1, %c16_i32 : i32
      %c16_i32_9 = arith.constant 16 : i32
      %18 = arith.subi %c16_i32_9, %17 : i32
      %19 = tpu.iota {dimensions = array<i32: 0>} : vector<16x128xi32>
      %c0 = arith.constant 0 : index
      %c0_10 = arith.constant 0 : index
      %20 = vector.load %arg3[%c0, %c0_10] : memref<16x128xf32, #tpu.memory_space<vmem>>, vector<16x128xf32>
      %21 = vector.broadcast %18 : i32 to vector<16x128xi32>
      %22 = arith.cmpi slt, %19, %21 : vector<16x128xi32>
      %cst = arith.constant 0.000000e+00 : f32
      %23 = vector.broadcast %cst : f32 to vector<16x128xf32>
      %24 = arith.select %22, %20, %23 : vector<16x128xi1>, vector<16x128xf32>
      %c0_11 = arith.constant 0 : index
      %c0_12 = arith.constant 0 : index
      %25 = vector.load %arg5[%c0_11, %c0_12] : memref<16x128xf32, #tpu.memory_space<vmem>>, vector<16x128xf32>
      %26 = arith.mulf %24, %24 : vector<16x128xf32>
      %27 = vector.shape_cast %26 : vector<16x128xf32> to vector<1x16x128xf32>
      %cst_13 = arith.constant dense<0.000000e+00> : vector<16x128xf32>
      %28 = vector.multi_reduction <add>, %27, %cst_13 [0] : vector<1x16x128xf32> to vector<16x128xf32>
      %29 = arith.addf %25, %28 : vector<16x128xf32>
      %c0_14 = arith.constant 0 : index
      %c0_15 = arith.constant 0 : index
      %30 = vector.load %arg5[%c0_14, %c0_15] : memref<16x128xf32, #tpu.memory_space<vmem>>, vector<16x128xf32>
      tpu.vector_store %arg5[%c0_14, %c0_15], %29 {strides = array<i32>} : memref<16x128xf32, #tpu.memory_space<vmem>>, vector<16x128xf32>,
    } else {
    }
    return
  }
  func.func @transform_0(%arg0: i32, %arg1: i32) -> (i32, i32) {
    %c1_i32 = arith.constant 1 : i32
    %0 = arith.muli %arg0, %c1_i32 : i32
    %1 = arith.addi %0, %arg1 : i32
    %c0_i32 = arith.constant 0 : i32
    %2 = arith.minsi %1, %c0_i32 : i32
    %c0_i32_0 = arith.constant 0 : i32
    %c0_i32_1 = arith.constant 0 : i32
    return %2, %c0_i32_0 : i32, i32
  }
  func.func @transform_1(%arg0: i32, %arg1: i32) -> (i32, i32) {
    %c1_i32 = arith.constant 1 : i32
    %0 = arith.muli %arg0, %c1_i32 : i32
    %1 = arith.addi %0, %arg1 : i32
    %c0_i32 = arith.constant 0 : i32
    %2 = arith.minsi %1, %c0_i32 : i32
    %c0_i32_0 = arith.constant 0 : i32
    %c0_i32_1 = arith.constant 0 : i32
    return %2, %c0_i32_0 : i32, i32
  }
  func.func @transform_2(%arg0: i32, %arg1: i32) -> (i32, i32) {
    %c0_i32 = arith.constant 0 : i32
    %c0_i32_0 = arith.constant 0 : i32
    return %arg0, %c0_i32 : i32, i32
  }
  func.func @transform_3(%arg0: i32, %arg1: i32) -> (i32, i32) {
    %c0_i32 = arith.constant 0 : i32
    %c0_i32_0 = arith.constant 0 : i32
    return %arg0, %c0_i32 : i32, i32
  }
}

</mosaic_0001>

<llo_original>
// kernel: tpu_custom_call.1
$region0: #{tpu_custom_call.1}
  #allocation0 [shape = 'u32[]', space=smem, size = 0x4, offset = 0x4, fixed_abs, tag = 'smem constant byte address 0x4 - core index']
  #allocation1 [shape = 'u32[144,128]{1,0:T(1,128)}', space=vmem, size = 0x12000, scoped, tag = 'internal scratch']
  %s0 = inlined_call_operand.hbm [shape: f32[16,128], index: 0, kind: input, shape index: {}]
  %s1 = inlined_call_operand.hbm [shape: f32[16,128], index: 1, kind: input, shape index: {}]
  %s2 = inlined_call_operand.hbm [shape: f32[16,128], index: 2, kind: output, shape index: {0}]
  %s3 = inlined_call_operand.hbm [shape: f32[16,128], index: 3, kind: output, shape index: {1}]
  %4 = xla_tuple %s2, %s3
  %s5 = sld [smem:[#allocation0]]
  $region54: #{tpu_custom_call.1} parent=0
    _
  %s7 = ssub.s32 1, %s5
  %s8 = scalar_select 0, %s7, %s5
  $region1: #{tpu_custom_call.1} parent=0
    #allocation2 [shape = 'u8[8192]{0}', space=vmem, size = 0x2000, scoped, tag = 'input window, operand 0, single buffered']
    #allocation3 [shape = 's32[1]{0}', space=sflag, size = 0x4, scoped, tag = 'scoped memory for tpu_custom_call.1']
    #allocation4 [shape = 's32[1]{0}', space=sflag, size = 0x4, scoped, tag = 'scoped memory for tpu_custom_call.1']
    #allocation5 [shape = 'u8[8192]{0}', space=vmem, size = 0x2000, scoped, tag = 'input window, operand 1, single buffered']
    #allocation6 [shape = 's32[1]{0}', space=sflag, size = 0x4, scoped, tag = 'scoped memory for tpu_custom_call.1']
    #allocation7 [shape = 'u8[8192]{0}', space=vmem, size = 0x2000, scoped, tag = 'output window, operand 0, single buffered']
    #allocation8 [shape = 'u8[8192]{0}', space=vmem, size = 0x2000, scoped, tag = 'output window, operand 1, single buffered']
    #allocation9 [shape = 's32[1]{0}', space=sflag, size = 0x4, scoped, tag = 'scoped memory for tpu_custom_call.1']
    %9 = vsyncpa [#allocation3], 0
    %10 = vsyncpa [#allocation6], 0
    %11 = vsyncpa [#allocation4], 0
    %12 = vsyncpa [#allocation9], 0
    // Predicated region
    $region2: #{tpu_custom_call.1} parent=1 // pred_check
      _
    $region3: #{tpu_custom_call.1} parent=1 // pred_check_branch
      %14 = sbr.rel (0) target = $region5
    $region4: #{tpu_custom_call.1} parent=1 // pred_region
      %s15 = sadd.s32 0, 0
      %p16 = scmp.lt.s32.totalorder %s15, 0
      %s17 = scalar_select %p16, %s15, 0
      %s18 = smul.u32 2, %s17
      %s20 = ssub.s32 256, 256
      %21 = vsyncadd [#allocation3], %s20
      %s22 = smul.addr %s18, 128
      %s23 = scalar_lea.hbm %s0, %s22
      %s24 = sshll.u32 [#allocation2], 4
      %s25 = int_to_ptr.vmem [resolvable:$true] %s24
      %30 = dma.hbm_to_vmem [thread:$0]  %s23, 256, %s25, [#allocation3], 128, 128, 8
    $region5: #{tpu_custom_call.1} parent=1 // pred_fallthru
      _
    // Predicated region
    $region6: #{tpu_custom_call.1} parent=1 // pred_check
      _
    $region7: #{tpu_custom_call.1} parent=1 // pred_check_branch
      %32 = sbr.rel (0) target = $region9
    $region8: #{tpu_custom_call.1} parent=1 // pred_region
      %s33 = sadd.s32 0, 0
      %p34 = scmp.lt.s32.totalorder %s33, 0
      %s35 = scalar_select %p34, %s33, 0
      %s36 = smul.u32 2, %s35
      %s38 = ssub.s32 256, 256
      %39 = vsyncadd [#allocation6], %s38
      %s40 = smul.addr %s36, 128
      %s41 = scalar_lea.hbm %s1, %s40
      %s42 = sshll.u32 [#allocation5], 4
      %s43 = int_to_ptr.vmem [resolvable:$true] %s42
      %48 = dma.hbm_to_vmem [thread:$0]  %s41, 256, %s43, [#allocation6], 128, 128, 8
    $region9: #{tpu_custom_call.1} parent=1 // pred_fallthru
      _
    // Predicated region
    $region10: #{tpu_custom_call.1} parent=1 // pred_check
      _
    $region11: #{tpu_custom_call.1} parent=1 // pred_check_branch
      %50 = sbr.rel (0) target = $region13
    $region12: #{tpu_custom_call.1} parent=1 // pred_region
      %51 = dma.done [#allocation3], 256
    $region13: #{tpu_custom_call.1} parent=1 // pred_fallthru
      _
    // Predicated region
    $region14: #{tpu_custom_call.1} parent=1 // pred_check
      _
    $region15: #{tpu_custom_call.1} parent=1 // pred_check_branch
      %53 = sbr.rel (0) target = $region17
    $region16: #{tpu_custom_call.1} parent=1 // pred_region
      %54 = dma.done [#allocation6], 256
    $region17: #{tpu_custom_call.1} parent=1 // pred_fallthru
      _
    %s55 = sadd.s32 0, 0
    %p56 = scmp.lt.s32.totalorder %s55, 0
    %s57 = scalar_select %p56, %s55, 0
    %s58 = smul.u32 2, %s57
    %s59 = sadd.s32 0, 0
    %p60 = scmp.lt.s32.totalorder %s59, 0
    %s61 = scalar_select %p60, %s59, 0
    %s62 = smul.u32 2, %s61
    %s63 = sadd.s32 0, 0
    %p64 = scmp.eq.s32.totalorder 0, 0
    // Predicated region
    $region18: #{tpu_custom_call.1} parent=1 // pred_check
      %p65 = pneg %p64
    $region19: #{tpu_custom_call.1} parent=1 // pred_check_branch
      %67 = sbr.rel (%p65) target = $region21
    $region20: #{tpu_custom_call.1} parent=1 // pred_region
      %68 = vst [vmem:[#allocation7] sm:$0xff] 0.0
      %69 = vst [vmem:[#allocation7 + $0x8] sm:$0xff] 0.0
      %70 = vst [vmem:[#allocation8] sm:$0xff] 0.0
      %71 = vst [vmem:[#allocation8 + $0x8] sm:$0xff] 0.0
    $region21: #{tpu_custom_call.1} parent=1 // pred_fallthru
      _
    %p72 = scmp.lt.s32.totalorder %s63, 0
    // Predicated region
    $region22: #{tpu_custom_call.1} parent=1 // pred_check
      %p73 = pneg %p72
    $region23: #{tpu_custom_call.1} parent=1 // pred_check_branch
      %75 = sbr.rel (%p73) target = $region25
    $region24: #{tpu_custom_call.1} parent=1 // pred_region
      %v76 = vld [vmem:[#allocation2] sm:$0xff]
      %v77 = vld [vmem:[#allocation2 + $0x8] sm:$0xff]
      %v78 = vadd.f32 %v76, -1.0
      %v79 = vadd.f32 %v77, -1.0
      %v80 = vld [vmem:[#allocation7] sm:$0xff]
      %v81 = vld [vmem:[#allocation7 + $0x8] sm:$0xff]
      %v82 = vmul.f32 %v78, %v78
      %v83 = vmul.f32 %v79, %v79
      %v84 = vadd.f32 %v82, 0.0
      %v85 = vadd.f32 %v83, 0.0
      %v86 = vadd.f32 %v80, %v84
      %v87 = vadd.f32 %v81, %v85
      %88 = vst [vmem:[#allocation7] sm:$0xff] %v86
      %89 = vst [vmem:[#allocation7 + $0x8] sm:$0xff] %v87
    $region25: #{tpu_custom_call.1} parent=1 // pred_fallthru
      _
    %p90 = scmp.eq.s32.totalorder %s63, 0
    // Predicated region
    $region26: #{tpu_custom_call.1} parent=1 // pred_check
      %p91 = pneg %p90
    $region27: #{tpu_custom_call.1} parent=1 // pred_check_branch
      %93 = sbr.rel (%p91) target = $region29
    $region28: #{tpu_custom_call.1} parent=1 // pred_region
      %s94 = smul.u32 %s63, 16
      %s95 = ssub.s32 16, %s94
      %v96 = vlaneseq
      %v97 = vshrl.u32 %v96, 7
      %v98 = vadd.s32 %v97, 8
      %v99 = vld [vmem:[#allocation2] sm:$0xff]
      %v100 = vld [vmem:[#allocation2 + $0x8] sm:$0xff]
      %v101 = vadd.f32 %v99, -1.0
      %v102 = vadd.f32 %v100, -1.0
      %v103 = vstv %s95
      %vm104 = vcmp.lt.s32.totalorder %v97, %v103
      %vm105 = vcmp.lt.s32.totalorder %v98, %v103
      %v106 = vsel %vm104, %v101, 0.0
      %v107 = vsel %vm105, %v102, 0.0
      %v108 = vld [vmem:[#allocation7] sm:$0xff]
      %v109 = vld [vmem:[#allocation7 + $0x8] sm:$0xff]
      %v110 = vmul.f32 %v106, %v106
      %v111 = vmul.f32 %v107, %v107
      %v112 = vadd.f32 %v110, 0.0
      %v113 = vadd.f32 %v111, 0.0
      %v114 = vadd.f32 %v108, %v112
      %v115 = vadd.f32 %v109, %v113
      %116 = vst [vmem:[#allocation7] sm:$0xff] %v114
      %117 = vst [vmem:[#allocation7 + $0x8] sm:$0xff] %v115
    $region29: #{tpu_custom_call.1} parent=1 // pred_fallthru
      _
    // Predicated region
    $region30: #{tpu_custom_call.1} parent=1 // pred_check
      %p118 = pneg %p72
    $region31: #{tpu_custom_call.1} parent=1 // pred_check_branch
      %120 = sbr.rel (%p118) target = $region33
    $region32: #{tpu_custom_call.1} parent=1 // pred_region
      %v121 = vld [vmem:[#allocation5] sm:$0xff]
      %v122 = vld [vmem:[#allocation5 + $0x8] sm:$0xff]
      %v123 = vld [vmem:[#allocation8] sm:$0xff]
      %v124 = vld [vmem:[#allocation8 + $0x8] sm:$0xff]
      %v125 = vmul.f32 %v121, %v121
      %v126 = vmul.f32 %v122, %v122
      %v127 = vadd.f32 %v125, 0.0
      %v128 = vadd.f32 %v126, 0.0
      %v129 = vadd.f32 %v123, %v127
      %v130 = vadd.f32 %v124, %v128
      %131 = vst [vmem:[#allocation8] sm:$0xff] %v129
      %132 = vst [vmem:[#allocation8 + $0x8] sm:$0xff] %v130
    $region33: #{tpu_custom_call.1} parent=1 // pred_fallthru
      _
    // Predicated region
    $region34: #{tpu_custom_call.1} parent=1 // pred_check
      %p133 = pneg %p90
    $region35: #{tpu_custom_call.1} parent=1 // pred_check_branch
      %135 = sbr.rel (%p133) target = $region37
    $region36: #{tpu_custom_call.1} parent=1 // pred_region
      %s136 = smul.u32 %s63, 16
      %s137 = ssub.s32 16, %s136
      %v138 = vlaneseq
      %v139 = vshrl.u32 %v138, 7
      %v140 = vadd.s32 %v139, 8
      %v141 = vld [vmem:[#allocation5] sm:$0xff]
      %v142 = vld [vmem:[#allocation5 + $0x8] sm:$0xff]
      %v143 = vstv %s137
      %vm144 = vcmp.lt.s32.totalorder %v139, %v143
      %vm145 = vcmp.lt.s32.totalorder %v140, %v143
      %v146 = vsel %vm144, %v141, 0.0
      %v147 = vsel %vm145, %v142, 0.0
      %v148 = vld [vmem:[#allocation8] sm:$0xff]
      %v149 = vld [vmem:[#allocation8 + $0x8] sm:$0xff]
      %v150 = vmul.f32 %v146, %v146
      %v151 = vmul.f32 %v147, %v147
      %v152 = vadd.f32 %v150, 0.0
      %v153 = vadd.f32 %v151, 0.0
      %v154 = vadd.f32 %v148, %v152
      %v155 = vadd.f32 %v149, %v153
      %156 = vst [vmem:[#allocation8] sm:$0xff] %v154
      %157 = vst [vmem:[#allocation8 + $0x8] sm:$0xff] %v155
    $region37: #{tpu_custom_call.1} parent=1 // pred_fallthru
      _
    // Predicated region
    $region38: #{tpu_custom_call.1} parent=1 // pred_check
      _
    $region39: #{tpu_custom_call.1} parent=1 // pred_check_branch
      %159 = sbr.rel (0) target = $region41
    $region40: #{tpu_custom_call.1} parent=1 // pred_region
      %s161 = ssub.s32 256, 256
      %162 = vsyncadd [#allocation4], %s161
      %s163 = sshll.u32 [#allocation7], 4
      %s164 = int_to_ptr.vmem [resolvable:$true] %s163
      %169 = dma.vmem_to_hbm [thread:$0]  %s164, 256, %s2, [#allocation4], 128, 128, 8
    $region41: #{tpu_custom_call.1} parent=1 // pred_fallthru
      _
    // Predicated region
    $region42: #{tpu_custom_call.1} parent=1 // pred_check
      _
    $region43: #{tpu_custom_call.1} parent=1 // pred_check_branch
      %171 = sbr.rel (0) target = $region45
    $region44: #{tpu_custom_call.1} parent=1 // pred_region
      %s173 = ssub.s32 256, 256
      %174 = vsyncadd [#allocation9], %s173
      %s175 = sshll.u32 [#allocation8], 4
      %s176 = int_to_ptr.vmem [resolvable:$true] %s175
      %181 = dma.vmem_to_hbm [thread:$0]  %s176, 256, %s3, [#allocation9], 128, 128, 8
    $region45: #{tpu_custom_call.1} parent=1 // pred_fallthru
      _
    // Predicated region
    $region46: #{tpu_custom_call.1} parent=1 // pred_check
      _
    $region47: #{tpu_custom_call.1} parent=1 // pred_check_branch
      %183 = sbr.rel (0) target = $region49
    $region48: #{tpu_custom_call.1} parent=1 // pred_region
      %184 = dma.done [#allocation4], 256
    $region49: #{tpu_custom_call.1} parent=1 // pred_fallthru
      _
    // Predicated region
    $region50: #{tpu_custom_call.1} parent=1 // pred_check
      _
    $region51: #{tpu_custom_call.1} parent=1 // pred_check_branch
      %186 = sbr.rel (0) target = $region53
    $region52: #{tpu_custom_call.1} parent=1 // pred_region
      %187 = dma.done [#allocation9], 256
    $region53: #{tpu_custom_call.1} parent=1 // pred_fallthru
      _
    %188 = vsyncpa [#allocation3], 1
    %189 = vsyncpa [#allocation6], 1
    %190 = vsyncpa [#allocation4], 1
    %191 = vsyncpa [#allocation9], 1

</llo_original>
